<compile_context>
chip_gen: v5e
topology: v5e:2x2
jax: 0.10.0
libtpu: 0.0.40
codegen_flags: <defaults>
</compile_context>

<pallas_src>
import functools
import math

import jax
import jax.numpy as jnp
from jax.experimental import pallas as pl
from jax.experimental.pallas import tpu as pltpu


def _pe_kernel(seed_ref, x_ref, pe_ref, o_ref, *, p, train, total_f):
    # x_ref: (bt, tf) block; pe_ref: (1, tf) block (broadcast over batch rows).
    y = x_ref[...].astype(jnp.float32) + pe_ref[...]

    if train and p > 0.0:
        # Inverted dropout (training mode).  Counter-based RNG: hash the global
        # element index mixed with the seed (lowbias32 finalizer).  Stochastic;
        # not bit-identical to a particular torch RNG stream.
        bt_blk, tf_blk = x_ref.shape
        row0 = (pl.program_id(1) * bt_blk).astype(jnp.uint32)
        col0 = (pl.program_id(0) * tf_blk).astype(jnp.uint32)
        rows = jax.lax.broadcasted_iota(jnp.int32, (bt_blk, tf_blk), 0).astype(jnp.uint32) + row0
        cols = jax.lax.broadcasted_iota(jnp.int32, (bt_blk, tf_blk), 1).astype(jnp.uint32) + col0
        idx = rows * jnp.uint32(total_f) + cols

        h = idx ^ (seed_ref[0].astype(jnp.uint32) * jnp.uint32(0x9E3779B1))
        h = h ^ (h >> 16)
        h = h * jnp.uint32(0x7FEB352D)
        h = h ^ (h >> 15)
        h = h * jnp.uint32(0x846CA68B)
        h = h ^ (h >> 16)

        thresh = jnp.uint32(min(int(round(p * 4294967296.0)), 4294967295))
        keep = h >= thresh   # unsigned compare -> keep prob ~= 1 - p
        y = jnp.where(keep, y * jnp.float32(1.0 / (1.0 - p)), jnp.float32(0.0))

    o_ref[...] = y.astype(o_ref.dtype)


def make_positional_table(d_model: int, seq_len: int) -> jax.Array:
    """Deterministic sin/cos table, identical to the PyTorch __init__ (f32)."""
    position = jnp.arange(seq_len, dtype=jnp.float32)[:, None]          # (S, 1)
    div_term = jnp.exp(
        jnp.arange(0, d_model, 2, dtype=jnp.float32) * (-math.log(10000.0) / d_model)
    )                                                                   # (D/2,)
    pe = jnp.zeros((seq_len, d_model), dtype=jnp.float32)
    pe = pe.at[:, 0::2].set(jnp.sin(position * div_term))
    pe = pe.at[:, 1::2].set(jnp.cos(position * div_term))
    return pe


def positional_encoding(x, pe, *, dropout_p=0.0, training=False, seed=0, use_pallas=None):
    """Forward pass: dropout(x + pe[:S, :]).  x: (B, S, D), pe: (seq_len, D) f32."""
    B, S, D = x.shape
    apply_dropout = bool(training) and float(dropout_p) > 0.0

    # torch.nn.Dropout(p=1.0) in training mode zeros everything.
    if apply_dropout and float(dropout_p) >= 1.0:
        return jnp.zeros_like(x)

    if use_pallas is None:
        # A plain broadcast-add already hits the HBM roofline under XLA; keep
        # the Pallas path for the fused-dropout case or large tensors.
        use_pallas = apply_dropout or x.size >= (1 << 20)

    if not use_pallas and not apply_dropout:
        y = x.astype(jnp.float32) + pe[:S, :].astype(jnp.float32)[None, :, :]
        return y.astype(x.dtype)

    # Lane-dense layout: flatten (S, D) -> F so the output last dim is a
    # multiple of 128 (or the full extent), avoiding masked partial stores.
    F = S * D
    x2 = x.reshape(B, F)
    pe2 = pe[:S, :].astype(jnp.float32).reshape(1, F)

    itemsize = jnp.dtype(x.dtype).itemsize
    sub = 8 * max(1, 4 // itemsize)          # packed sublane tile: 8 f32 / 16 bf16 / 32 int8
    if B <= sub:
        bt = B                               # full extent is always a legal block dim
    else:
        bt = (min(B, 4 * sub) // sub) * sub  # up to 32 f32 / 64 bf16 rows per block

    # ~4 MiB of x per block: near the HBM-roofline plateau on v5e/v6e/v7x while
    # the double-buffered pipeline (~4.25x the x tile) stays inside the scoped
    # VMEM limit set below.
    budget_elems = (4 * 1024 * 1024) // itemsize
    tf = max(128, (budget_elems // max(bt, 1)) // 128 * 128)
    if tf >= F:
        tf = F

    nb = pl.cdiv(B, bt)
    nf = pl.cdiv(F, tf)
    # Give v7x's two TensorCores something to shard when the tensor is small.
    if nb * nf < 2 and F >= 256:
        tf = ((pl.cdiv(F, 2) + 127) // 128) * 128
        nf = pl.cdiv(F, tf)

    seed_arr = jnp.asarray([seed], dtype=jnp.int32)
    kernel = functools.partial(
        _pe_kernel, p=float(dropout_p), train=apply_dropout, total_f=F
    )

    out = pl.pallas_call(
        kernel,
        out_shape=jax.ShapeDtypeStruct((B, F), x.dtype),
        grid_spec=pltpu.PrefetchScalarGridSpec(
            num_scalar_prefetch=1,  # seed lives in SMEM; changing it never recompiles
            # Batch axis innermost: pe's block index (0, f) is invariant in b, so
            # Pallas elides the pe DMA on consecutive batch steps.
            grid=(nf, nb),
            in_specs=[
                pl.BlockSpec((bt, tf), lambda f, b, seed: (b, f)),  # x block
                pl.BlockSpec((1, tf), lambda f, b, seed: (0, f)),   # pe block (resident over b)
            ],
            out_specs=pl.BlockSpec((bt, tf), lambda f, b, seed: (b, f)),
        ),
        compiler_params=pltpu.CompilerParams(
            dimension_semantics=("parallel", "parallel"),
            vmem_limit_bytes=48 * 1024 * 1024,
        ),
    )(seed_arr, x2, pe2)

    return out.reshape(B, S, D)


if __name__ == "__main__":
    d_model = 32
    seq_len = 8
    batch = 2
    dropout_p = 0.1  # nn.Dropout(0.1); identity in eval mode

    key = jax.random.PRNGKey(0)
    x = jax.random.normal(key, (batch, seq_len, d_model), dtype=jnp.float32)

    pe = make_positional_table(d_model, seq_len)
    ref = x + pe[None, :seq_len, :]

    # Eval-mode forward (dropout is identity), forced through the Pallas kernel.
    y = positional_encoding(x, pe, dropout_p=dropout_p, training=False, use_pallas=True)
    y = jax.block_until_ready(y)
    assert jnp.allclose(y, ref, atol=1e-6), "mismatch vs reference"

    # Training-mode forward: exercise the fused dropout path (stochastic);
    # every element must equal ref / (1 - p) (kept) or 0 (dropped).
    y_tr = positional_encoding(x, pe, dropout_p=dropout_p, training=True, seed=123)
    y_tr = jax.block_until_ready(y_tr)
    assert y_tr.shape == x.shape
    scaled_ref = ref / (1.0 - dropout_p)
    ok = jnp.isclose(y_tr, scaled_ref, atol=1e-5) | jnp.isclose(y_tr, 0.0, atol=1e-6)
    assert bool(jnp.all(ok)), "dropout output is neither scaled-kept nor dropped"

    print("KERNEL_OK")
</pallas_src>

<mosaic_0001>
module attributes {stable_mosaic.version = 11 : i64} {
  func.func @_pe_kernel(%arg0: i32, %arg1: i32, %arg2: memref<1xi32, #tpu.memory_space<smem>>, %arg3: memref<2x128xf32, #tpu.memory_space<vmem>>, %arg4: memref<1x128xf32, #tpu.memory_space<vmem>>, %arg5: memref<2x128xf32, #tpu.memory_space<vmem>>) attributes {dimension_semantics = [#tpu.dimension_semantics<parallel>, #tpu.dimension_semantics<parallel>], iteration_bounds = array<i64: 2, 1>, scalar_prefetch = 1 : i64, scratch_operands = 0 : i64, tpu.core_type = #tpu.core_type<tc>, window_params = [{transform_indices = @transform_0, window_bounds = array<i64: 2, 128>}, {transform_indices = @transform_1, window_bounds = array<i64: 1, 128>}, {transform_indices = @transform_2, window_bounds = array<i64: 2, 128>}]} {
    %c0 = arith.constant 0 : index
    %c0_0 = arith.constant 0 : index
    %0 = vector.load %arg3[%c0, %c0_0] : memref<2x128xf32, #tpu.memory_space<vmem>>, vector<2x128xf32>
    %c0_1 = arith.constant 0 : index
    %c0_2 = arith.constant 0 : index
    %1 = vector.load %arg4[%c0_1, %c0_2] : memref<1x128xf32, #tpu.memory_space<vmem>>, vector<1x128xf32>
    %2 = vector.broadcast %1 : vector<1x128xf32> to vector<2x128xf32>
    %3 = arith.addf %0, %2 : vector<2x128xf32>
    %c0_3 = arith.constant 0 : index
    %c0_4 = arith.constant 0 : index
    %4 = vector.load %arg5[%c0_3, %c0_4] : memref<2x128xf32, #tpu.memory_space<vmem>>, vector<2x128xf32>
    tpu.vector_store %arg5[%c0_3, %c0_4], %3 {strides = array<i32>} : memref<2x128xf32, #tpu.memory_space<vmem>>, vector<2x128xf32>,
    return
  }
  func.func @transform_0(%arg0: i32, %arg1: i32, %arg2: memref<1xi32, #tpu.memory_space<smem>>) -> (i32, i32) {
    %c0_i32 = arith.constant 0 : i32
    return %arg1, %arg0 : i32, i32
  }
  func.func @transform_1(%arg0: i32, %arg1: i32, %arg2: memref<1xi32, #tpu.memory_space<smem>>) -> (i32, i32) {
    %c0_i32 = arith.constant 0 : i32
    %c0_i32_0 = arith.constant 0 : i32
    return %c0_i32, %arg0 : i32, i32
  }
  func.func @transform_2(%arg0: i32, %arg1: i32, %arg2: memref<1xi32, #tpu.memory_space<smem>>) -> (i32, i32) {
    %c0_i32 = arith.constant 0 : i32
    return %arg1, %arg0 : i32, i32
  }
}

</mosaic_0001>

<llo_original>
// kernel: tpu_custom_call.1
$region0: #{tpu_custom_call.1}
  #allocation0 [shape = 'u32[]', space=smem, size = 0x4, offset = 0x4, fixed_abs, tag = 'smem constant byte address 0x4 - core index']
  #allocation1 [shape = 'u32[72,128]{1,0:T(1,128)}', space=vmem, size = 0x9000, scoped, tag = 'internal scratch']
  #allocation2 [shape = 's32[1]{0}', space=sflag, size = 0x4, scoped, tag = 'scoped memory for tpu_custom_call.1']
  #allocation3 [shape = 's32[1]{0:T(128)S(6)}', space=smem, size = 0x200, scoped, tag = 'prefetched SMEM operand 0']
  %s0 = inlined_call_operand.<no memory space> [shape: s32[1], index: 0, kind: input, shape index: {}]
  %s1 = inlined_call_operand.hbm [shape: f32[2,256], index: 1, kind: input, shape index: {}]
  %s2 = inlined_call_operand.vmem [shape: f32[1,256], index: 2, kind: input, shape index: {}]
  %s3 = inlined_call_operand.hbm [shape: f32[2,256], index: 3, kind: output, shape index: {}]
  %s4 = sld [smem:[#allocation0]]
  $region45: #{tpu_custom_call.1} parent=0
    _
  %s6 = ssub.s32 1, %s4
  %s7 = scalar_select 0, %s6, %s4
  %8 = sst [smem:[#allocation3]] %s0
  $region1: #{tpu_custom_call.1} parent=0
    #allocation4 [shape = 'u8[2048]{0}', space=vmem, size = 0x800, scoped, tag = 'input window, operand 1']
    #allocation5 [shape = 's32[2]{0}', space=sflag, size = 0x8, scoped, tag = 'scoped memory for tpu_custom_call.1']
    #allocation6 [shape = 's32[2]{0}', space=sflag, size = 0x8, scoped, tag = 'scoped memory for tpu_custom_call.1']
    #allocation7 [shape = 'u8[2048]{0}', space=vmem, size = 0x800, scoped, tag = 'output window, operand 0']
    %9 = vsyncpa [#allocation5], 0
    %s10 = scalar_lea.sflag [#allocation5], 1
    %11 = vsyncpa %s10, 0
    %12 = vsyncpa [#allocation6], 0
    %s13 = scalar_lea.sflag [#allocation6], 1
    %14 = vsyncpa %s13, 0
    loop: start=0, step=1, limit=4
    $region2: #{tpu_custom_call.1} parent=1 // loop_pre_header
      _
    $region3: #{tpu_custom_call.1} parent=1 // loop_header
      %s16 = sphi 0, %s20
      %p17 = scmp.ge.s32.totalorder %s16, 4
      %s23 = sphi 0, %s35
      %s24 = sphi 0, %s31
      %s25 = sphi 0, %s23
      %s26 = sphi 0, %s24
      %s27 = sphi 0, %s25
      %s28 = sphi 0, %s26
      %s40 = sphi 0, %s42
      %s43 = sphi 0, %s40
      %s44 = sphi 0, %s43
      %s60 = sphi 0, %s44
      %s66 = sphi 0, %s68
      %s69 = sphi 0, %s66
      %s70 = sphi 0, %s69
      %s86 = sphi 0, %s70
      %s94 = sphi 0, %s96
      %s97 = sphi 0, %s94
      %s98 = sphi 0, %s97
      %s114 = sphi 0, %s98
    $region4: #{tpu_custom_call.1} parent=1 // loop_header_branch
      %19 = sbr.rel (%p17) target = $region8
    $region5: #{tpu_custom_call.1} parent=1 // loop_body
      %s21 = ssub.s32 %s16, 1
      %s22 = ssub.s32 %s16, 2
      %s29 = sadd.s32 1, %s24
      %p30 = scmp.ge.s32.totalorder %s29, 1
      %s31 = scalar_select %p30, 0, %s29
      %s32 = sadd.s32 1, %s23
      %s33 = scalar_select %p30, %s32, %s23
      %p34 = scmp.ge.s32.totalorder %s33, 2
      %s35 = scalar_select %p34, 0, %s33
      %s36 = ssub.s32 %s24, %s31
      %s37 = ssub.s32 %s23, %s35
      %s38 = sor.u32 %s36, %s37
      %p39 = scmp.eq.s32.totalorder %s38, 0
      %s41 = sadd.s32 %s40, 1
      %s42 = scalar_select %p39, %s40, %s41
      %p45 = pneg %p39
      %p46 = scmp.eq.s32.totalorder %s16, 1
      %p47 = por %p45, %p46
      %p48 = scmp.ne.s32.totalorder %s40, %s43
      %p49 = scmp.eq.s32.totalorder %s16, 0
      %p50 = por %p48, %p49
      %p51 = scmp.ne.s32.totalorder %s40, %s43
      %p52 = scmp.eq.s32.totalorder %s21, 1
      %p53 = por %p51, %p52
      %p54 = scmp.ne.s32.totalorder %s43, %s44
      %p55 = scmp.eq.s32.totalorder %s21, 0
      %p56 = por %p54, %p55
      %p57 = scmp.ne.s32.totalorder %s43, %s44
      %p58 = scmp.eq.s32.totalorder %s22, 1
      %p59 = por %p57, %p58
      %p61 = scmp.ne.s32.totalorder %s44, %s60
      %p62 = scmp.eq.s32.totalorder %s22, 0
      %p63 = por %p61, %p62
      %s64 = ssub.s32 %s23, %s35
      %p65 = scmp.eq.s32.totalorder %s64, 0
      %s67 = sadd.s32 %s66, 1
      %s68 = scalar_select %p65, %s66, %s67
      %p71 = pneg %p65
      %p72 = scmp.eq.s32.totalorder %s16, 1
      %p73 = por %p71, %p72
      %p74 = scmp.ne.s32.totalorder %s66, %s69
      %p75 = scmp.eq.s32.totalorder %s16, 0
      %p76 = por %p74, %p75
      %p77 = scmp.ne.s32.totalorder %s66, %s69
      %p78 = scmp.eq.s32.totalorder %s21, 1
      %p79 = por %p77, %p78
      %p80 = scmp.ne.s32.totalorder %s69, %s70
      %p81 = scmp.eq.s32.totalorder %s21, 0
      %p82 = por %p80, %p81
      %p83 = scmp.ne.s32.totalorder %s69, %s70
      %p84 = scmp.eq.s32.totalorder %s22, 1
      %p85 = por %p83, %p84
      %p87 = scmp.ne.s32.totalorder %s70, %s86
      %p88 = scmp.eq.s32.totalorder %s22, 0
      %p89 = por %p87, %p88
      %s90 = ssub.s32 %s24, %s31
      %s91 = ssub.s32 %s23, %s35
      %s92 = sor.u32 %s90, %s91
      %p93 = scmp.eq.s32.totalorder %s92, 0
      %s95 = sadd.s32 %s94, 1
      %s96 = scalar_select %p93, %s94, %s95
      %p99 = pneg %p93
      %p100 = scmp.eq.s32.totalorder %s16, 1
      %p101 = por %p99, %p100
      %p102 = scmp.ne.s32.totalorder %s94, %s97
      %p103 = scmp.eq.s32.totalorder %s16, 0
      %p104 = por %p102, %p103
      %p105 = scmp.ne.s32.totalorder %s94, %s97
      %p106 = scmp.eq.s32.totalorder %s21, 1
      %p107 = por %p105, %p106
      %p108 = scmp.ne.s32.totalorder %s97, %s98
      %p109 = scmp.eq.s32.totalorder %s21, 0
      %p110 = por %p108, %p109
      %p111 = scmp.ne.s32.totalorder %s97, %s98
      %p112 = scmp.eq.s32.totalorder %s22, 1
      %p113 = por %p111, %p112
      %p115 = scmp.ne.s32.totalorder %s98, %s114
      %p116 = scmp.eq.s32.totalorder %s22, 0
      %p117 = por %p115, %p116
      %p118 = scmp.le.s32.totalorder 1, %s16
      %p119 = scmp.lt.s32.totalorder %s16, 3
      %p120 = pnand %p118, %p119
      %p121 = pneg %p120
      // Predicated region
      $region9: #{tpu_custom_call.1} parent=5 // pred_check
        _
      $region10: #{tpu_custom_call.1} parent=5 // pred_check_branch
        %123 = sbr.rel (%p120) target = $region12
      $region11: #{tpu_custom_call.1} parent=5 // pred_region
        %s124 = ssub.s32 %s16, 1
      $region12: #{tpu_custom_call.1} parent=5 // pred_fallthru
        _
      %p125 = scmp.lt.s32.totalorder %s16, 2
      // Predicated region
      $region13: #{tpu_custom_call.1} parent=5 // pred_check
        %p126 = pneg %p125
      $region14: #{tpu_custom_call.1} parent=5 // pred_check_branch
        %128 = sbr.rel (%p126) target = $region16
      $region15: #{tpu_custom_call.1} parent=5 // pred_region
        // Predicated region
        $region17: #{tpu_custom_call.1} parent=15 // pred_check
          %p129 = pneg %p50
        $region18: #{tpu_custom_call.1} parent=15 // pred_check_branch
          %131 = sbr.rel (%p129) target = $region20
        $region19: #{tpu_custom_call.1} parent=15 // pred_region
          %s132 = sand.u32 %s40, 1
          %s133 = scalar_lea.sflag [#allocation5], %s132
          %s134 = sand.u32 %s40, 1
          %s135 = smul.addr %s134, 2
          %s136 = scalar_lea.vmem [#allocation4], %s135
          %138 = vsyncadd %s133, 0
          %s139 = smul.addr %s24, 2
          %s140 = sadd.s32 %s23, %s139
          %s141 = smul.addr %s140, 2
          %s142 = scalar_lea.hbm %s1, %s141
          %s144 = sshll.u32 %s142, 4
          %s145 = int_to_ptr.hbm [resolvable:$true] %s144
          %s146 = sshll.u32 %s136, 4
          %s147 = int_to_ptr.vmem [resolvable:$true] %s146
          %149 = dma.hbm_to_vmem [thread:$0]  %s145, 32, %s147, %s133
        $region20: #{tpu_custom_call.1} parent=15 // pred_fallthru
          _
        // Predicated region
        $region21: #{tpu_custom_call.1} parent=15 // pred_check
          %p150 = pneg %p76
        $region22: #{tpu_custom_call.1} parent=15 // pred_check_branch
          %152 = sbr.rel (%p150) target = $region24
        $region23: #{tpu_custom_call.1} parent=15 // pred_region
          %p153 = scmp.lt.s32.totalorder %s23, 1
          %s154 = scalar_select %p153, %s23, 1
          %s155 = scalar_lea.vmem %s2, %s154
        $region24: #{tpu_custom_call.1} parent=15 // pred_fallthru
          _
      $region16: #{tpu_custom_call.1} parent=5 // pred_fallthru
        _
      %p156 = scmp.le.s32.totalorder 1, %s16
      %p157 = scmp.lt.s32.totalorder %s16, 3
      %p158 = pnand %p156, %p157
      %p159 = pneg %p158
      // Predicated region
      $region25: #{tpu_custom_call.1} parent=5 // pred_check
        _
      $region26: #{tpu_custom_call.1} parent=5 // pred_check_branch
        %161 = sbr.rel (%p158) target = $region28
      $region27: #{tpu_custom_call.1} parent=5 // pred_region
        %s162 = ssub.s32 %s16, 1
        %s163 = sand.u32 %s43, 1
        %s164 = scalar_lea.sflag [#allocation5], %s163
        %s165 = sand.u32 %s43, 1
        %s166 = smul.addr %s165, 2
        %s167 = scalar_lea.vmem [#allocation4], %s166
        // Predicated region
        $region29: #{tpu_custom_call.1} parent=27 // pred_check
          %p168 = pneg %p56
        $region30: #{tpu_custom_call.1} parent=27 // pred_check_branch
          %170 = sbr.rel (%p168) target = $region32
        $region31: #{tpu_custom_call.1} parent=27 // pred_region
          %172 = dma.done %s164, 32
        $region32: #{tpu_custom_call.1} parent=27 // pred_fallthru
          _
        %s173 = sand.u32 %s43, 1
        %s174 = scalar_lea.sflag [#allocation5], %s173
        %s175 = sand.u32 %s43, 1
        %s176 = smul.addr %s175, 2
        %s177 = scalar_lea.vmem [#allocation4], %s176
        %p178 = pneg %p56
        %p179 = pneg %p53
        %p180 = scmp.lt.s32.totalorder %s25, 1
        %s181 = scalar_select %p180, %s25, 1
        %s182 = scalar_lea.vmem %s2, %s181
        %p183 = pneg %p82
        %p184 = pneg %p79
        %p185 = pneg %p110
        %p186 = pneg %p107
        %s187 = sand.u32 %s97, 1
        %s188 = scalar_lea.sflag [#allocation6], %s187
        %s189 = sand.u32 %s97, 1
        %s190 = smul.addr %s189, 2
        %s191 = scalar_lea.vmem [#allocation7], %s190
        %p192 = scmp.lt.s32.totalorder %s25, 1
        %s193 = scalar_select %p192, %s25, 1
        %s194 = scalar_lea.vmem %s2, %s193
        %v195 = vld [vmem:[%s167] sm:$0x3]
        %v196 = vld [vmem:[%s194] sm:$0x1]
        %v198 = vperm.slane %v196, 0
        %v200 = vadd.f32 %v195, %v198
        %201 = vst [vmem:[%s191] sm:$0x3] %v200
        %s202 = sand.u32 %s97, 1
        %s203 = scalar_lea.sflag [#allocation6], %s202
        %s204 = sand.u32 %s97, 1
        %s205 = smul.addr %s204, 2
        %s206 = scalar_lea.vmem [#allocation7], %s205
        // Predicated region
        $region33: #{tpu_custom_call.1} parent=27 // pred_check
          %p207 = pneg %p107
        $region34: #{tpu_custom_call.1} parent=27 // pred_check_branch
          %209 = sbr.rel (%p207) target = $region36
        $region35: #{tpu_custom_call.1} parent=27 // pred_region
          %211 = vsyncadd %s203, 0
          %s212 = smul.addr %s26, 2
          %s213 = sadd.s32 %s25, %s212
          %s214 = smul.addr %s213, 2
          %s215 = scalar_lea.hbm %s3, %s214
          %s217 = sshll.u32 %s206, 4
          %s218 = int_to_ptr.vmem [resolvable:$true] %s217
          %s219 = sshll.u32 %s215, 4
          %s220 = int_to_ptr.hbm [resolvable:$true] %s219
          %222 = dma.vmem_to_hbm [thread:$0]  %s218, 32, %s220, %s203
        $region36: #{tpu_custom_call.1} parent=27 // pred_fallthru
          _
      $region28: #{tpu_custom_call.1} parent=5 // pred_fallthru
        _
      %p223 = scmp.le.s32.totalorder 2, %s16
      // Predicated region
      $region37: #{tpu_custom_call.1} parent=5 // pred_check
        %p224 = pneg %p223
      $region38: #{tpu_custom_call.1} parent=5 // pred_check_branch
        %226 = sbr.rel (%p224) target = $region40
      $region39: #{tpu_custom_call.1} parent=5 // pred_region
        %s227 = ssub.s32 %s16, 2
        // Predicated region
        $region41: #{tpu_custom_call.1} parent=39 // pred_check
          %p228 = pneg %p113
        $region42: #{tpu_custom_call.1} parent=39 // pred_check_branch
          %230 = sbr.rel (%p228) target = $region44
        $region43: #{tpu_custom_call.1} parent=39 // pred_region
          %s231 = sand.u32 %s98, 1
          %s232 = scalar_lea.sflag [#allocation6], %s231
          %s233 = sand.u32 %s98, 1
          %s234 = smul.addr %s233, 2
          %s235 = scalar_lea.vmem [#allocation7], %s234
          %237 = dma.done %s232, 32
        $region44: #{tpu_custom_call.1} parent=39 // pred_fallthru
          _
      $region40: #{tpu_custom_call.1} parent=5 // pred_fallthru
        _
    $region6: #{tpu_custom_call.1} parent=1 // loop_footer
      %s20 = sadd.s32 1, %s16
    $region7: #{tpu_custom_call.1} parent=1 // loop_footer_branch
      %15 = sbr.rel target = $region3
    $region8: #{tpu_custom_call.1} parent=1 // loop_exit
      _
    %238 = vsyncpa [#allocation5], 1
    %s239 = scalar_lea.sflag [#allocation5], 1
    %240 = vsyncpa %s239, 1
    %241 = vsyncpa [#allocation6], 1
    %s242 = scalar_lea.sflag [#allocation6], 1
    %243 = vsyncpa %s242, 1

</llo_original>
